<compile_context>
chip_gen: v7x
topology: tpu7x:2x2x1
jax: 0.10.0
libtpu: 0.0.40
codegen_flags: <defaults>
</compile_context>

<pallas_src>
import functools
import math

import jax
import jax.numpy as jnp
from jax.experimental import pallas as pl
from jax.experimental.pallas import tpu as pltpu


def _round_up(x: int, m: int) -> int:
    return ((x + m - 1) // m) * m


def _make_kernel(tg: int):
    def kernel(xs_ref, ws_ref, out_ref):
        # xs_ref : (TG, B_TILE, K_eff) bf16  stacked [x_r | x_i] activations per mode group
        # ws_ref : (TG, K_eff, N_eff)  bf16  stacked complex-mixing weights per mode group
        # out_ref: (TG, B_TILE, N_eff) f32   stacked [out_r | out_i] per mode group
        for j in range(tg):  # static unroll: one MXU matmul + one dense slab store per group
            out_ref[j] = jnp.dot(xs_ref[j], ws_ref[j],
                                 preferred_element_type=jnp.float32)

    return kernel


@functools.partial(jax.jit, static_argnames=("modes",))
def spectral_conv1d(x, weight_real, weight_imag, *, modes):
    """SpectralConv1D forward.  x: (B, C_in, L) float32  ->  (B, L, C_out) float32."""
    B, Cin, L = x.shape
    Cout = weight_real.shape[1]
    L_ft = L // 2 + 1
    m = min(modes, L_ft)

    # ---- tiling ------------------------------------------------------------------
    K = 2 * Cin                               # stacked (real|imag) input channels
    N = 2 * Cout                              # stacked (real|imag) output channels
    K_pad = _round_up(K, 128)                 # lane-aligned contraction dim
    N_pad = _round_up(N, 128)                 # lane-dense output dim

    # Pair two modes per matmul (block-diagonal weights) when a single mode would only
    # give a 128-deep / 128-wide matmul: fills the 256x256 MXU on v6e/v7x.
    PAIR = 2 if (K_pad == 128 and N_pad == 128) else 1
    K_eff = PAIR * K_pad
    N_eff = PAIR * N_pad

    # Batch tile: ~256 target, rounded to 16 (bf16 sublane packing), never over-padded.
    if B <= 256:
        NB = 1
        B_TILE = _round_up(B, 16)
    else:
        NB = -(-B // 256)
        B_TILE = _round_up(-(-B // NB), 16)

    # Mode-group tiling sized from a double-buffered VMEM budget (~32 MiB, safe on v7x).
    G = -(-m // PAIR)                         # number of matmul groups
    per_group_db = 2 * (B_TILE * K_eff * 2 + K_eff * N_eff * 2 + B_TILE * N_eff * 4)
    TG = max(1, min(G, 32, (32 * 1024 * 1024) // per_group_db))
    G_pad = _round_up(G, TG)
    GB = G_pad // TG
    M_total = G_pad * PAIR                    # padded number of modes fed to the MXU

    # v7x megacore: make sure a parallel grid axis has >= 2 compute-carrying blocks.
    if GB == 1 and NB == 1 and B >= 32:
        NB = 2
        B_TILE = _round_up(-(-B // NB), 16)
    B_pad = B_TILE * NB

    # ---- spectral activations: stacked [x_r | x_i], mode-group major, bf16 --------
    # Everything below the rfft touches only the m kept modes (m << L), so these
    # layout passes are negligible next to the fft itself.
    x_ft = jnp.fft.rfft(x.astype(jnp.float32), axis=-1)          # (B, Cin, L_ft)
    xk = x_ft[:, :, :m]                                          # (B, Cin, m)
    xs = jnp.concatenate([jnp.real(xk), jnp.imag(xk)], axis=1)   # (B, 2Cin, m)
    xs = jnp.transpose(xs, (2, 0, 1)).astype(jnp.bfloat16)       # (m, B, 2Cin)
    xs = jnp.pad(xs, ((0, M_total - m), (0, B_pad - B), (0, K_pad - K)))
    # pack PAIR consecutive modes side by side along lanes: (G_pad, B_pad, K_eff)
    xs = xs.reshape(G_pad, PAIR, B_pad, K_pad)
    xs = jnp.transpose(xs, (0, 2, 1, 3)).reshape(G_pad, B_pad, K_eff)

    # ---- stacked complex weights: [[Wr, Wi], [-Wi, Wr]] per mode, bf16 ------------
    wr = jnp.transpose(weight_real[:, :, :m], (2, 0, 1))         # (m, Cin, Cout)
    wi = jnp.transpose(weight_imag[:, :, :m], (2, 0, 1))
    w2 = jnp.concatenate(
        [jnp.concatenate([wr, wi], axis=2),                      # real input rows
         jnp.concatenate([-wi, wr], axis=2)],                    # imag input rows
        axis=1)                                                  # (m, 2Cin, 2Cout)
    w2 = jnp.pad(w2.astype(jnp.bfloat16),
                 ((0, M_total - m), (0, K_pad - K), (0, N_pad - N)))
    if PAIR == 2:
        # Block-diagonal mode-pair weights: (G_pad, 2*K_pad, 2*N_pad).
        w_e, w_o = w2[0::2], w2[1::2]
        z = jnp.zeros_like(w_e)
        w2 = jnp.concatenate(
            [jnp.concatenate([w_e, z], axis=2),
             jnp.concatenate([z, w_o], axis=2)], axis=1)

    kernel = _make_kernel(TG)

    flops = 2 * G_pad * B_pad * K_eff * N_eff
    bytes_accessed = (G_pad * B_pad * K_eff * 2      # xs read
                      + G_pad * K_eff * N_eff * 2    # weights read once per mode block
                      + G_pad * B_pad * N_eff * 4)   # out written

    out = pl.pallas_call(
        kernel,
        out_shape=jax.ShapeDtypeStruct((G_pad, B_pad, N_eff), jnp.float32),
        grid=(GB, NB),  # batch innermost -> weight block index unchanged, stays VMEM-resident
        in_specs=[
            pl.BlockSpec((TG, B_TILE, K_eff), lambda g, b: (g, b, 0)),
            pl.BlockSpec((TG, K_eff, N_eff), lambda g, b: (g, 0, 0)),
        ],
        out_specs=pl.BlockSpec((TG, B_TILE, N_eff), lambda g, b: (g, b, 0)),
        compiler_params=pltpu.CompilerParams(
            dimension_semantics=("parallel", "parallel"),
            vmem_limit_bytes=48 * 1024 * 1024,   # tiles are budgeted well below this
        ),
        cost_estimate=pl.CostEstimate(
            flops=flops, transcendentals=0, bytes_accessed=bytes_accessed),
    )(xs, w2)

    # ---- unpack mode pairs, assemble kept-mode spectrum, zero tail, invert --------
    out = out.reshape(G_pad, B_pad, PAIR, N_pad)
    out = jnp.transpose(out, (0, 2, 1, 3)).reshape(M_total, B_pad, N_pad)
    out_m = out[:m, :B, :]                                       # (m, B, N_pad)
    out_ft = jax.lax.complex(out_m[..., :Cout], out_m[..., Cout:2 * Cout])
    out_ft = jnp.transpose(out_ft, (1, 0, 2))                    # (B, m, Cout)  (tiny)
    out_ft = jnp.pad(out_ft, ((0, 0), (0, L_ft - m), (0, 0)))    # zero high-frequency tail
    y = jnp.fft.irfft(out_ft, n=L, axis=1)                       # (B, L, Cout)
    return y


def spectral_conv1d_reference(x, weight_real, weight_imag, modes):
    """Pure-JAX transcription of the PyTorch forward (for verification)."""
    B, C, L = x.shape
    x_ft = jnp.fft.rfft(x, axis=-1)
    L_ft = x_ft.shape[-1]
    m = min(modes, L_ft)
    x_r = jnp.real(x_ft[:, :, :m])
    x_i = jnp.imag(x_ft[:, :, :m])
    w_r = weight_real[:, :, :m]
    w_i = weight_imag[:, :, :m]
    out_r = jnp.einsum('bcm,com->bom', x_r, w_r) - jnp.einsum('bcm,com->bom', x_i, w_i)
    out_i = jnp.einsum('bcm,com->bom', x_r, w_i) + jnp.einsum('bcm,com->bom', x_i, w_r)
    Cout = weight_real.shape[1]
    out_ft = jnp.zeros((B, Cout, L_ft), dtype=jnp.complex64)
    out_ft = out_ft.at[:, :, :m].set(jax.lax.complex(out_r, out_i))
    y = jnp.fft.irfft(out_ft, n=L, axis=-1)
    return jnp.transpose(y, (0, 2, 1))


def _check(x, w_r, w_i, modes):
    y = jax.block_until_ready(spectral_conv1d(x, w_r, w_i, modes=modes))
    y_ref = spectral_conv1d_reference(x, w_r, w_i, modes)
    assert y.shape == y_ref.shape, (y.shape, y_ref.shape)
    err = float(jnp.max(jnp.abs(y - y_ref)))
    scale = float(jnp.max(jnp.abs(y_ref))) + 1e-6
    assert err / scale < 5e-2, f"max relative error {err / scale:.4f}"
    return y


if __name__ == "__main__":
    key = jax.random.PRNGKey(0)
    kx1, kr1, ki1, kx2, kr2, ki2, kx3, kr3, ki3 = jax.random.split(key, 9)

    # 1) Primary small config (matches the module's shape convention); exercises mode pairing.
    B, Cin, Cout, L, modes = 2, 4, 6, 16, 5
    scale = 1.0 / math.sqrt(Cin)
    x = jax.random.normal(kx1, (B, Cin, L), dtype=jnp.float32)
    w_r = scale * jax.random.normal(kr1, (Cin, Cout, modes), dtype=jnp.float32)
    w_i = scale * jax.random.normal(ki1, (Cin, Cout, modes), dtype=jnp.float32)
    _check(x, w_r, w_i, modes)

    # 2) Larger batch: exercises the two-batch-tile (megacore) path and multiple mode groups.
    B2, Cin2, Cout2, L2, modes2 = 40, 8, 8, 64, 12
    x2 = jax.random.normal(kx2, (B2, Cin2, L2), dtype=jnp.float32)
    w_r2 = (1.0 / math.sqrt(Cin2)) * jax.random.normal(kr2, (Cin2, Cout2, modes2), dtype=jnp.float32)
    w_i2 = (1.0 / math.sqrt(Cin2)) * jax.random.normal(ki2, (Cin2, Cout2, modes2), dtype=jnp.float32)
    _check(x2, w_r2, w_i2, modes2)

    # 3) Wide channels: exercises the un-paired (K_pad > 128) path.
    B3, Cin3, Cout3, L3, modes3 = 2, 96, 80, 32, 8
    x3 = jax.random.normal(kx3, (B3, Cin3, L3), dtype=jnp.float32)
    w_r3 = (1.0 / math.sqrt(Cin3)) * jax.random.normal(kr3, (Cin3, Cout3, modes3), dtype=jnp.float32)
    w_i3 = (1.0 / math.sqrt(Cin3)) * jax.random.normal(ki3, (Cin3, Cout3, modes3), dtype=jnp.float32)
    _check(x3, w_r3, w_i3, modes3)

    print("KERNEL_OK")
</pallas_src>

<mosaic_0001>
module attributes {stable_mosaic.version = 11 : i64} {
  func.func @kernel(%arg0: i32, %arg1: i32, %arg2: memref<3x16x256xbf16, #tpu.memory_space<vmem>>, %arg3: memref<3x256x256xbf16, #tpu.memory_space<vmem>>, %arg4: memref<3x16x256xf32, #tpu.memory_space<vmem>>) attributes {dimension_semantics = [#tpu.dimension_semantics<parallel>, #tpu.dimension_semantics<parallel>], iteration_bounds = array<i64: 1, 1>, scalar_prefetch = 0 : i64, scratch_operands = 0 : i64, tpu.core_type = #tpu.core_type<tc>, window_params = [{transform_indices = @transform_0, window_bounds = array<i64: 3, 16, 256>}, {transform_indices = @transform_1, window_bounds = array<i64: 3, 256, 256>}, {transform_indices = @transform_2, window_bounds = array<i64: 3, 16, 256>}]} {
    %c0 = arith.constant 0 : index
    %c0_0 = arith.constant 0 : index
    %c0_1 = arith.constant 0 : index
    %0 = vector.load %arg2[%c0, %c0_0, %c0_1] : memref<3x16x256xbf16, #tpu.memory_space<vmem>>, vector<1x16x256xbf16>
    %1 = vector.shape_cast %0 : vector<1x16x256xbf16> to vector<16x256xbf16>
    %c0_2 = arith.constant 0 : index
    %c0_3 = arith.constant 0 : index
    %c0_4 = arith.constant 0 : index
    %2 = vector.load %arg3[%c0_2, %c0_3, %c0_4] : memref<3x256x256xbf16, #tpu.memory_space<vmem>>, vector<1x256x256xbf16>
    %3 = vector.shape_cast %2 : vector<1x256x256xbf16> to vector<256x256xbf16>
    %cst = arith.constant dense<0.000000e+00> : vector<16x256xf32>
    %4 = tpu.matmul %1, %3, %cst {dimension_numbers = #tpu.dot_dimension_numbers<[1], [0], [0], [1], [0, 0, 1, 1], [], []>} : vector<16x256xbf16>, vector<256x256xbf16>, vector<16x256xf32> -> vector<16x256xf32>
    %c0_5 = arith.constant 0 : index
    %c0_6 = arith.constant 0 : index
    %c0_7 = arith.constant 0 : index
    %5 = vector.load %arg4[%c0_5, %c0_6, %c0_7] : memref<3x16x256xf32, #tpu.memory_space<vmem>>, vector<1x16x256xf32>
    %6 = vector.shape_cast %5 : vector<1x16x256xf32> to vector<16x256xf32>
    %7 = vector.shape_cast %4 : vector<16x256xf32> to vector<1x16x256xf32>
    tpu.vector_store %arg4[%c0_5, %c0_6, %c0_7], %7 {strides = array<i32>} : memref<3x16x256xf32, #tpu.memory_space<vmem>>, vector<1x16x256xf32>,
    %c1 = arith.constant 1 : index
    %c0_8 = arith.constant 0 : index
    %c0_9 = arith.constant 0 : index
    %8 = vector.load %arg2[%c1, %c0_8, %c0_9] : memref<3x16x256xbf16, #tpu.memory_space<vmem>>, vector<1x16x256xbf16>
    %9 = vector.shape_cast %8 : vector<1x16x256xbf16> to vector<16x256xbf16>
    %c1_10 = arith.constant 1 : index
    %c0_11 = arith.constant 0 : index
    %c0_12 = arith.constant 0 : index
    %10 = vector.load %arg3[%c1_10, %c0_11, %c0_12] : memref<3x256x256xbf16, #tpu.memory_space<vmem>>, vector<1x256x256xbf16>
    %11 = vector.shape_cast %10 : vector<1x256x256xbf16> to vector<256x256xbf16>
    %cst_13 = arith.constant dense<0.000000e+00> : vector<16x256xf32>
    %12 = tpu.matmul %9, %11, %cst_13 {dimension_numbers = #tpu.dot_dimension_numbers<[1], [0], [0], [1], [0, 0, 1, 1], [], []>} : vector<16x256xbf16>, vector<256x256xbf16>, vector<16x256xf32> -> vector<16x256xf32>
    %c1_14 = arith.constant 1 : index
    %c0_15 = arith.constant 0 : index
    %c0_16 = arith.constant 0 : index
    %13 = vector.load %arg4[%c1_14, %c0_15, %c0_16] : memref<3x16x256xf32, #tpu.memory_space<vmem>>, vector<1x16x256xf32>
    %14 = vector.shape_cast %13 : vector<1x16x256xf32> to vector<16x256xf32>
    %15 = vector.shape_cast %12 : vector<16x256xf32> to vector<1x16x256xf32>
    tpu.vector_store %arg4[%c1_14, %c0_15, %c0_16], %15 {strides = array<i32>} : memref<3x16x256xf32, #tpu.memory_space<vmem>>, vector<1x16x256xf32>,
    %c2 = arith.constant 2 : index
    %c0_17 = arith.constant 0 : index
    %c0_18 = arith.constant 0 : index
    %16 = vector.load %arg2[%c2, %c0_17, %c0_18] : memref<3x16x256xbf16, #tpu.memory_space<vmem>>, vector<1x16x256xbf16>
    %17 = vector.shape_cast %16 : vector<1x16x256xbf16> to vector<16x256xbf16>
    %c2_19 = arith.constant 2 : index
    %c0_20 = arith.constant 0 : index
    %c0_21 = arith.constant 0 : index
    %18 = vector.load %arg3[%c2_19, %c0_20, %c0_21] : memref<3x256x256xbf16, #tpu.memory_space<vmem>>, vector<1x256x256xbf16>
    %19 = vector.shape_cast %18 : vector<1x256x256xbf16> to vector<256x256xbf16>
    %cst_22 = arith.constant dense<0.000000e+00> : vector<16x256xf32>
    %20 = tpu.matmul %17, %19, %cst_22 {dimension_numbers = #tpu.dot_dimension_numbers<[1], [0], [0], [1], [0, 0, 1, 1], [], []>} : vector<16x256xbf16>, vector<256x256xbf16>, vector<16x256xf32> -> vector<16x256xf32>
    %c2_23 = arith.constant 2 : index
    %c0_24 = arith.constant 0 : index
    %c0_25 = arith.constant 0 : index
    %21 = vector.load %arg4[%c2_23, %c0_24, %c0_25] : memref<3x16x256xf32, #tpu.memory_space<vmem>>, vector<1x16x256xf32>
    %22 = vector.shape_cast %21 : vector<1x16x256xf32> to vector<16x256xf32>
    %23 = vector.shape_cast %20 : vector<16x256xf32> to vector<1x16x256xf32>
    tpu.vector_store %arg4[%c2_23, %c0_24, %c0_25], %23 {strides = array<i32>} : memref<3x16x256xf32, #tpu.memory_space<vmem>>, vector<1x16x256xf32>,
    return
  }
  func.func @transform_0(%arg0: i32, %arg1: i32) -> (i32, i32, i32) {
    %c0_i32 = arith.constant 0 : i32
    %c0_i32_0 = arith.constant 0 : i32
    return %arg0, %arg1, %c0_i32 : i32, i32, i32
  }
  func.func @transform_1(%arg0: i32, %arg1: i32) -> (i32, i32, i32) {
    %c0_i32 = arith.constant 0 : i32
    %c0_i32_0 = arith.constant 0 : i32
    %c0_i32_1 = arith.constant 0 : i32
    return %arg0, %c0_i32, %c0_i32_0 : i32, i32, i32
  }
  func.func @transform_2(%arg0: i32, %arg1: i32) -> (i32, i32, i32) {
    %c0_i32 = arith.constant 0 : i32
    %c0_i32_0 = arith.constant 0 : i32
    return %arg0, %arg1, %c0_i32 : i32, i32, i32
  }
}

</mosaic_0001>

<llo_original>
// kernel: reverse.0
$region0: #{reverse.0}
  %s0 = inlined_call_operand.vmem [shape: f32[2,6,7], index: 0, kind: input, shape index: {}]
  %s1 = inlined_call_operand.vmem [shape: f32[2,6,7], index: 1, kind: output, shape index: {}]
  %v2 = vlaneseq
  %v3 = vsub.s32 6, %v2
  %4 = vset.pattern.permute.xlu0 %v3
  $region1: #{reverse.0} parent=0
    #allocation0 [shape = 'u8[8192]{0}', space=vmem, size = 0x2000, scoped, tag = 'operand span for operand 0']
    #allocation1 [shape = 'u8[8192]{0}', space=vmem, size = 0x2000, scoped, tag = 'operand span for operand 1']
    // Predicated region
    $region2: #{reverse.0} parent=1 // pred_check
      _
    $region3: #{reverse.0} parent=1 // pred_check_branch
      %6 = sbr.rel (0) target = $region5
    $region4: #{reverse.0} parent=1 // pred_region
      // Predicated region
      $region6: #{reverse.0} parent=4 // pred_check
        _
      $region7: #{reverse.0} parent=4 // pred_check_branch
        %8 = sbr.rel (0) target = $region9
      $region8: #{reverse.0} parent=4 // pred_region
        // Predicated region
        $region21: #{reverse.0} parent=8 // pred_check
          _
        $region22: #{reverse.0} parent=8 // pred_check_branch
          %25 = sbr.rel (0) target = $region24
        $region23: #{reverse.0} parent=8 // pred_region
          loop: start=0, step=1, limit=1
          $region25: #{reverse.0} parent=23 // loop_pre_header
            _
          $region26: #{reverse.0} parent=23 // loop_header
            %s27 = sphi 0, %s31
            %p28 = scmp.ge.s32.totalorder %s27, 1
            %s32 = sphi %s0, %s0
            %s33 = sphi [#allocation0], [#allocation0]
          $region27: #{reverse.0} parent=23 // loop_header_branch
            %30 = sbr.rel (%p28) target = $region31
          $region28: #{reverse.0} parent=23 // loop_body
            %v34 = vld [vmem:[%s32] sm:$0xff]
            %35 = vst [vmem:[%s33] sm:$0xff] %v34
            %v36 = vld [vmem:[%s32 + $0x8] sm:$0xff]
            %37 = vst [vmem:[%s33 + $0x8] sm:$0xff] %v36
          $region29: #{reverse.0} parent=23 // loop_footer
            %s31 = sadd.s32 1, %s27
          $region30: #{reverse.0} parent=23 // loop_footer_branch
            %26 = sbr.rel target = $region26
          $region31: #{reverse.0} parent=23 // loop_exit
            _
        $region24: #{reverse.0} parent=8 // pred_fallthru
          _
        // Predicated region
        $region32: #{reverse.0} parent=8 // pred_check
          _
        $region33: #{reverse.0} parent=8 // pred_check_branch
          %39 = sbr.rel target = $region35
        $region34: #{reverse.0} parent=8 // pred_region
          _
        $region35: #{reverse.0} parent=8 // pred_fallthru
          _
      $region9: #{reverse.0} parent=4 // pred_fallthru
        _
      // Predicated region
      $region10: #{reverse.0} parent=4 // pred_check
        _
      $region11: #{reverse.0} parent=4 // pred_check_branch
        %10 = sbr.rel target = $region13
      $region12: #{reverse.0} parent=4 // pred_region
        loop: start=0, step=1, limit=1
        $region14: #{reverse.0} parent=12 // loop_pre_header
          _
        $region15: #{reverse.0} parent=12 // loop_header
          %s13 = sphi 0, %s17
          %p14 = scmp.ge.s32.totalorder %s13, 1
          %s18 = sphi %s0, %s0
          %s19 = sphi [#allocation0], [#allocation0]
        $region16: #{reverse.0} parent=12 // loop_header_branch
          %16 = sbr.rel (%p14) target = $region20
        $region17: #{reverse.0} parent=12 // loop_body
          %v20 = vld [vmem:[%s18] sm:$0xff]
          %21 = vst [vmem:[%s19] sm:$0xff] %v20
          %v22 = vld [vmem:[%s18 + $0x8] sm:$0xff]
          %23 = vst [vmem:[%s19 + $0x8] sm:$0xff] %v22
        $region18: #{reverse.0} parent=12 // loop_footer
          %s17 = sadd.s32 1, %s13
        $region19: #{reverse.0} parent=12 // loop_footer_branch
          %12 = sbr.rel target = $region15
        $region20: #{reverse.0} parent=12 // loop_exit
          _
      $region13: #{reverse.0} parent=4 // pred_fallthru
        _
    $region5: #{reverse.0} parent=1 // pred_fallthru
      _
    %40 = vnop
    %v41 = vld [vmem:[#allocation0] sm:$0xff]
    %42 = vperm.xlu0 %4, %v41
    %v43 = vpop.permute.xlu0 %42
    %44 = vst [vmem:[#allocation1] sm:$0xff] %v43
    %s45 = scalar_lea.vmem [#allocation1], 8
    %s46 = scalar_lea.vmem [#allocation0], 8
    %v47 = vld [vmem:[%s46] sm:$0xff]
    %48 = vperm.xlu0 %4, %v47
    %v49 = vpop.permute.xlu0 %48
    %50 = vst [vmem:[%s45] sm:$0xff] %v49
    // Predicated region
    $region36: #{reverse.0} parent=1 // pred_check
      _
    $region37: #{reverse.0} parent=1 // pred_check_branch
      %52 = sbr.rel (0) target = $region39
    $region38: #{reverse.0} parent=1 // pred_region
      // Predicated region
      $region40: #{reverse.0} parent=38 // pred_check
        _
      $region41: #{reverse.0} parent=38 // pred_check_branch
        %54 = sbr.rel (0) target = $region43
      $region42: #{reverse.0} parent=38 // pred_region
        // Predicated region
        $region55: #{reverse.0} parent=42 // pred_check
          _
        $region56: #{reverse.0} parent=42 // pred_check_branch
          %71 = sbr.rel (0) target = $region58
        $region57: #{reverse.0} parent=42 // pred_region
          loop: start=0, step=1, limit=1
          $region59: #{reverse.0} parent=57 // loop_pre_header
            _
          $region60: #{reverse.0} parent=57 // loop_header
            %s73 = sphi 0, %s77
            %p74 = scmp.ge.s32.totalorder %s73, 1
            %s78 = sphi [#allocation1], [#allocation1]
            %s79 = sphi %s1, %s1
          $region61: #{reverse.0} parent=57 // loop_header_branch
            %76 = sbr.rel (%p74) target = $region65
          $region62: #{reverse.0} parent=57 // loop_body
            %v80 = vld [vmem:[%s78] sm:$0xff]
            %81 = vst [vmem:[%s79] sm:$0xff] %v80
            %v82 = vld [vmem:[%s78 + $0x8] sm:$0xff]
            %83 = vst [vmem:[%s79 + $0x8] sm:$0xff] %v82
          $region63: #{reverse.0} parent=57 // loop_footer
            %s77 = sadd.s32 1, %s73
          $region64: #{reverse.0} parent=57 // loop_footer_branch
            %72 = sbr.rel target = $region60
          $region65: #{reverse.0} parent=57 // loop_exit
            _
        $region58: #{reverse.0} parent=42 // pred_fallthru
          _
        // Predicated region
        $region66: #{reverse.0} parent=42 // pred_check
          _
        $region67: #{reverse.0} parent=42 // pred_check_branch
          %85 = sbr.rel target = $region69
        $region68: #{reverse.0} parent=42 // pred_region
          _
        $region69: #{reverse.0} parent=42 // pred_fallthru
          _
      $region43: #{reverse.0} parent=38 // pred_fallthru
        _
      // Predicated region
      $region44: #{reverse.0} parent=38 // pred_check
        _
      $region45: #{reverse.0} parent=38 // pred_check_branch
        %56 = sbr.rel target = $region47
      $region46: #{reverse.0} parent=38 // pred_region
        loop: start=0, step=1, limit=1
        $region48: #{reverse.0} parent=46 // loop_pre_header
          _
        $region49: #{reverse.0} parent=46 // loop_header
          %s59 = sphi 0, %s63
          %p60 = scmp.ge.s32.totalorder %s59, 1
          %s64 = sphi [#allocation1], [#allocation1]
          %s65 = sphi %s1, %s1
        $region50: #{reverse.0} parent=46 // loop_header_branch
          %62 = sbr.rel (%p60) target = $region54
        $region51: #{reverse.0} parent=46 // loop_body
          %v66 = vld [vmem:[%s64] sm:$0xff]
          %67 = vst [vmem:[%s65] sm:$0xff] %v66
          %v68 = vld [vmem:[%s64 + $0x8] sm:$0xff]
          %69 = vst [vmem:[%s65 + $0x8] sm:$0xff] %v68
        $region52: #{reverse.0} parent=46 // loop_footer
          %s63 = sadd.s32 1, %s59
        $region53: #{reverse.0} parent=46 // loop_footer_branch
          %58 = sbr.rel target = $region49
        $region54: #{reverse.0} parent=46 // loop_exit
          _
      $region47: #{reverse.0} parent=38 // pred_fallthru
        _
    $region39: #{reverse.0} parent=1 // pred_fallthru
      _
    %86 = vnop

// kernel: spectral_conv1d.1
$region0: #{spectral_conv1d.1}
  #allocation0 [shape = 'u32[]', space=smem, size = 0x4, offset = 0x4, fixed_abs, tag = 'smem constant byte address 0x4 - core index']
  #allocation1 [shape = 'u32[144,128]{1,0:T(1,128)}', space=vmem, size = 0x12000, scoped, tag = 'internal scratch']
  %s0 = inlined_call_operand.vmem [shape: bf16[3,16,256], index: 0, kind: input, shape index: {}]
  %s1 = inlined_call_operand.vmem [shape: bf16[3,256,256], index: 1, kind: input, shape index: {}]
  %s2 = inlined_call_operand.vmem [shape: f32[3,16,256], index: 2, kind: output, shape index: {}]
  %s3 = sld [smem:[#allocation0]]
  $region18: #{spectral_conv1d.1} parent=0
    _
  %s5 = ssub.s32 1, %s3
  %s6 = scalar_select 0, %s5, %s3
  // Predicated region
  $region2: #{spectral_conv1d.1} parent=0 // pred_check
    _
  $region3: #{spectral_conv1d.1} parent=0 // pred_check_branch
    %8 = sbr.rel (0) target = $region5
  $region4: #{spectral_conv1d.1} parent=0 // pred_region
    _
  $region5: #{spectral_conv1d.1} parent=0 // pred_fallthru
    _
  // Predicated region
  $region6: #{spectral_conv1d.1} parent=0 // pred_check
    _
  $region7: #{spectral_conv1d.1} parent=0 // pred_check_branch
    %10 = sbr.rel (0) target = $region9
  $region8: #{spectral_conv1d.1} parent=0 // pred_region
    _
  $region9: #{spectral_conv1d.1} parent=0 // pred_fallthru
    _
  %v11 = vld [vmem:[%s0] sm:$0xff]
  %v12 = vld [vmem:[%s0 + $0x8] sm:$0xff]
  %v13 = vld [vmem:[%s1] sm:$0xff]
  %v14 = vld [vmem:[%s1 + $0x8] sm:$0xff]
  %v15 = vld [vmem:[%s1 + $0x10] sm:$0xff]
  %v16 = vld [vmem:[%s1 + $0x18] sm:$0xff]
  %v17 = vld [vmem:[%s1 + $0x20] sm:$0xff]
  %v18 = vld [vmem:[%s1 + $0x28] sm:$0xff]
  %v19 = vld [vmem:[%s1 + $0x30] sm:$0xff]
  %v20 = vld [vmem:[%s1 + $0x38] sm:$0xff]
  %v21 = vld [vmem:[%s1 + $0x40] sm:$0xff]
  %v22 = vld [vmem:[%s1 + $0x48] sm:$0xff]
  %v23 = vld [vmem:[%s1 + $0x50] sm:$0xff]
  %v24 = vld [vmem:[%s1 + $0x58] sm:$0xff]
  %v25 = vld [vmem:[%s1 + $0x60] sm:$0xff]
  %v26 = vld [vmem:[%s1 + $0x68] sm:$0xff]
  %v27 = vld [vmem:[%s1 + $0x70] sm:$0xff]
  %v28 = vld [vmem:[%s1 + $0x78] sm:$0xff]
  %v29 = vld [vmem:[%s1 + $0x80] sm:$0xff]
  %v30 = vld [vmem:[%s1 + $0x88] sm:$0xff]
  %v31 = vld [vmem:[%s1 + $0x90] sm:$0xff]
  %v32 = vld [vmem:[%s1 + $0x98] sm:$0xff]
  %v33 = vld [vmem:[%s1 + $0xa0] sm:$0xff]
  %v34 = vld [vmem:[%s1 + $0xa8] sm:$0xff]
  %v35 = vld [vmem:[%s1 + $0xb0] sm:$0xff]
  %v36 = vld [vmem:[%s1 + $0xb8] sm:$0xff]
  %v37 = vld [vmem:[%s1 + $0xc0] sm:$0xff]
  %v38 = vld [vmem:[%s1 + $0xc8] sm:$0xff]
  %v39 = vld [vmem:[%s1 + $0xd0] sm:$0xff]
  %v40 = vld [vmem:[%s1 + $0xd8] sm:$0xff]
  %v41 = vld [vmem:[%s1 + $0xe0] sm:$0xff]
  %v42 = vld [vmem:[%s1 + $0xe8] sm:$0xff]
  %v43 = vld [vmem:[%s1 + $0xf0] sm:$0xff]
  %v44 = vld [vmem:[%s1 + $0xf8] sm:$0xff]
  %v47 = vunpack.c.l.b16 %v11
  %v48 = vunpack.c.h.b16 %v11
  %v49 = vunpack.c.l.b16 %v12
  %v50 = vunpack.c.h.b16 %v12
  %v51 = vpack.c.b16 %v49, %v47
  %v52 = vpack.c.b16 %v50, %v48
  %v87 = vunpack.c.l.b16 %v13
  %v88 = vunpack.c.h.b16 %v13
  %v89 = vunpack.c.l.b16 %v14
  %v90 = vunpack.c.h.b16 %v14
  %v91 = vunpack.c.l.b16 %v15
  %v92 = vunpack.c.h.b16 %v15
  %v93 = vunpack.c.l.b16 %v16
  %v94 = vunpack.c.h.b16 %v16
  %v95 = vunpack.c.l.b16 %v17
  %v96 = vunpack.c.h.b16 %v17
  %v97 = vunpack.c.l.b16 %v18
  %v98 = vunpack.c.h.b16 %v18
  %v99 = vunpack.c.l.b16 %v19
  %v100 = vunpack.c.h.b16 %v19
  %v101 = vunpack.c.l.b16 %v20
  %v102 = vunpack.c.h.b16 %v20
  %v103 = vunpack.c.l.b16 %v21
  %v104 = vunpack.c.h.b16 %v21
  %v105 = vunpack.c.l.b16 %v22
  %v106 = vunpack.c.h.b16 %v22
  %v107 = vunpack.c.l.b16 %v23
  %v108 = vunpack.c.h.b16 %v23
  %v109 = vunpack.c.l.b16 %v24
  %v110 = vunpack.c.h.b16 %v24
  %v111 = vunpack.c.l.b16 %v25
  %v112 = vunpack.c.h.b16 %v25
  %v113 = vunpack.c.l.b16 %v26
  %v114 = vunpack.c.h.b16 %v26
  %v115 = vunpack.c.l.b16 %v27
  %v116 = vunpack.c.h.b16 %v27
  %v117 = vunpack.c.l.b16 %v28
  %v118 = vunpack.c.h.b16 %v28
  %v119 = vunpack.c.l.b16 %v29
  %v120 = vunpack.c.h.b16 %v29
  %v121 = vunpack.c.l.b16 %v30
  %v122 = vunpack.c.h.b16 %v30
  %v123 = vunpack.c.l.b16 %v31
  %v124 = vunpack.c.h.b16 %v31
  %v125 = vunpack.c.l.b16 %v32
  %v126 = vunpack.c.h.b16 %v32
  %v127 = vunpack.c.l.b16 %v33
  %v128 = vunpack.c.h.b16 %v33
  %v129 = vunpack.c.l.b16 %v34
  %v130 = vunpack.c.h.b16 %v34
  %v131 = vunpack.c.l.b16 %v35
  %v132 = vunpack.c.h.b16 %v35
  %v133 = vunpack.c.l.b16 %v36
  %v134 = vunpack.c.h.b16 %v36
  %v135 = vunpack.c.l.b16 %v37
  %v136 = vunpack.c.h.b16 %v37
  %v137 = vunpack.c.l.b16 %v38
  %v138 = vunpack.c.h.b16 %v38
  %v139 = vunpack.c.l.b16 %v39
  %v140 = vunpack.c.h.b16 %v39
  %v141 = vunpack.c.l.b16 %v40
  %v142 = vunpack.c.h.b16 %v40
  %v143 = vunpack.c.l.b16 %v41
  %v144 = vunpack.c.h.b16 %v41
  %v145 = vunpack.c.l.b16 %v42
  %v146 = vunpack.c.h.b16 %v42
  %v147 = vunpack.c.l.b16 %v43
  %v148 = vunpack.c.h.b16 %v43
  %v149 = vunpack.c.l.b16 %v44
  %v150 = vunpack.c.h.b16 %v44
  %v151 = vpack.c.b16 %v89, %v87
  %v152 = vpack.c.b16 %v90, %v88
  %v153 = vpack.c.b16 %v93, %v91
  %v154 = vpack.c.b16 %v94, %v92
  %v155 = vpack.c.b16 %v97, %v95
  %v156 = vpack.c.b16 %v98, %v96
  %v157 = vpack.c.b16 %v101, %v99
  %v158 = vpack.c.b16 %v102, %v100
  %v159 = vpack.c.b16 %v105, %v103
  %v160 = vpack.c.b16 %v106, %v104
  %v161 = vpack.c.b16 %v109, %v107
  %v162 = vpack.c.b16 %v110, %v108
  %v163 = vpack.c.b16 %v113, %v111
  %v164 = vpack.c.b16 %v114, %v112
  %v165 = vpack.c.b16 %v117, %v115
  %v166 = vpack.c.b16 %v118, %v116
  %v167 = vpack.c.b16 %v121, %v119
  %v168 = vpack.c.b16 %v122, %v120
  %v169 = vpack.c.b16 %v125, %v123
  %v170 = vpack.c.b16 %v126, %v124
  %v171 = vpack.c.b16 %v129, %v127
  %v172 = vpack.c.b16 %v130, %v128
  %v173 = vpack.c.b16 %v133, %v131
  %v174 = vpack.c.b16 %v134, %v132
  %v175 = vpack.c.b16 %v137, %v135
  %v176 = vpack.c.b16 %v138, %v136
  %v177 = vpack.c.b16 %v141, %v139
  %v178 = vpack.c.b16 %v142, %v140
  %v179 = vpack.c.b16 %v145, %v143
  %v180 = vpack.c.b16 %v146, %v144
  %v181 = vpack.c.b16 %v149, %v147
  %v182 = vpack.c.b16 %v150, %v148
  %215 = vmatprep.subr.bf16.mxu0 %v152
  %216 = vmatpush1.bf16.msra.mxu0 %v151
  %217 = vmatprep.subr.bf16.mxu0 %v154
  %218 = vmatpush1.bf16.msra.mxu0 %v153
  %219 = vmatprep.subr.bf16.mxu0 %v156
  %220 = vmatpush1.bf16.msra.mxu0 %v155
  %221 = vmatprep.subr.bf16.mxu0 %v158
  %222 = vmatpush1.bf16.msra.mxu0 %v157
  %223 = vmatprep.subr.bf16.mxu0 %v160
  %224 = vmatpush1.bf16.msra.mxu0 %v159
  %225 = vmatprep.subr.bf16.mxu0 %v162
  %226 = vmatpush1.bf16.msra.mxu0 %v161
  %227 = vmatprep.subr.bf16.mxu0 %v164
  %228 = vmatpush1.bf16.msra.mxu0 %v163
  %229 = vmatprep.subr.bf16.mxu0 %v166
  %230 = vmatpush1.bf16.msra.mxu0 %v165
  %231 = vmatprep.subr.bf16.mxu0 %v168
  %232 = vmatpush1.bf16.msra.mxu0 %v167
  %233 = vmatprep.subr.bf16.mxu0 %v170
  %234 = vmatpush1.bf16.msra.mxu0 %v169
  %235 = vmatprep.subr.bf16.mxu0 %v172
  %236 = vmatpush1.bf16.msra.mxu0 %v171
  %237 = vmatprep.subr.bf16.mxu0 %v174
  %238 = vmatpush1.bf16.msra.mxu0 %v173
  %239 = vmatprep.subr.bf16.mxu0 %v176
  %240 = vmatpush1.bf16.msra.mxu0 %v175
  %241 = vmatprep.subr.bf16.mxu0 %v178
  %242 = vmatpush1.bf16.msra.mxu0 %v177
  %243 = vmatprep.subr.bf16.mxu0 %v180
  %244 = vmatpush1.bf16.msra.mxu0 %v179
  %245 = vmatprep.subr.bf16.mxu0 %v182
  %246 = vmatpush1.bf16.msra.mxu0 %v181
  %247 = vmatprep.mubr.bf16.mxu0 %v52
  %248 = vmatmul.mubr.bf16.gmra.mrb[0].mxu0 %v51
  %v249 = vpop.f32.mrb[0].mxu0
  %v250 = vadd.f32 0.0, %v249
  %v251 = vpop.f32.mrb[0].mxu0
  %v252 = vadd.f32 0.0, %v251
  %v253 = vpop.f32.mrb[0].mxu0
  %v254 = vadd.f32 0.0, %v253
  %v255 = vpop.f32.mrb[0].mxu0
  %v256 = vadd.f32 0.0, %v255
  %257 = vdwg.mxu0
  %258 = vst [vmem:[%s2] sm:$0xff] %v250
  %259 = vst [vmem:[%s2 + $0x8] sm:$0xff] %v252
  %260 = vst [vmem:[%s2 + $0x10] sm:$0xff] %v254
  %261 = vst [vmem:[%s2 + $0x18] sm:$0xff] %v256
  %s262 = scalar_lea.vmem %s0, 16
  %v263 = vld [vmem:[%s262] sm:$0xff]
  %v264 = vld [vmem:[%s262 + $0x8] sm:$0xff]
  %s265 = scalar_lea.vmem %s1, 256
  %v266 = vld [vmem:[%s265] sm:$0xff]
  %v267 = vld [vmem:[%s265 + $0x8] sm:$0xff]
  %v268 = vld [vmem:[%s265 + $0x10] sm:$0xff]
  %v269 = vld [vmem:[%s265 + $0x18] sm:$0xff]
  %v270 = vld [vmem:[%s265 + $0x20] sm:$0xff]
  %v271 = vld [vmem:[%s265 + $0x28] sm:$0xff]
  %v272 = vld [vmem:[%s265 + $0x30] sm:$0xff]
  %v273 = vld [vmem:[%s265 + $0x38] sm:$0xff]
  %v274 = vld [vmem:[%s265 + $0x40] sm:$0xff]
  %v275 = vld [vmem:[%s265 + $0x48] sm:$0xff]
  %v276 = vld [vmem:[%s265 + $0x50] sm:$0xff]
  %v277 = vld [vmem:[%s265 + $0x58] sm:$0xff]
  %v278 = vld [vmem:[%s265 + $0x60] sm:$0xff]
  %v279 = vld [vmem:[%s265 + $0x68] sm:$0xff]
  %v280 = vld [vmem:[%s265 + $0x70] sm:$0xff]
  %v281 = vld [vmem:[%s265 + $0x78] sm:$0xff]
  %v282 = vld [vmem:[%s265 + $0x80] sm:$0xff]
  %v283 = vld [vmem:[%s265 + $0x88] sm:$0xff]
  %v284 = vld [vmem:[%s265 + $0x90] sm:$0xff]
  %v285 = vld [vmem:[%s265 + $0x98] sm:$0xff]
  %v286 = vld [vmem:[%s265 + $0xa0] sm:$0xff]
  %v287 = vld [vmem:[%s265 + $0xa8] sm:$0xff]
  %v288 = vld [vmem:[%s265 + $0xb0] sm:$0xff]
  %v289 = vld [vmem:[%s265 + $0xb8] sm:$0xff]
  %v290 = vld [vmem:[%s265 + $0xc0] sm:$0xff]
  %v291 = vld [vmem:[%s265 + $0xc8] sm:$0xff]
  %v292 = vld [vmem:[%s265 + $0xd0] sm:$0xff]
  %v293 = vld [vmem:[%s265 + $0xd8] sm:$0xff]
  %v294 = vld [vmem:[%s265 + $0xe0] sm:$0xff]
  %v295 = vld [vmem:[%s265 + $0xe8] sm:$0xff]
  %v296 = vld [vmem:[%s265 + $0xf0] sm:$0xff]
  %v297 = vld [vmem:[%s265 + $0xf8] sm:$0xff]
  %v300 = vunpack.c.l.b16 %v263
  %v301 = vunpack.c.h.b16 %v263
  %v302 = vunpack.c.l.b16 %v264
  %v303 = vunpack.c.h.b16 %v264
  %v304 = vpack.c.b16 %v302, %v300
  %v305 = vpack.c.b16 %v303, %v301
  %v340 = vunpack.c.l.b16 %v266
  %v341 = vunpack.c.h.b16 %v266
  %v342 = vunpack.c.l.b16 %v267
  %v343 = vunpack.c.h.b16 %v267
  %v344 = vunpack.c.l.b16 %v268
  %v345 = vunpack.c.h.b16 %v268
  %v346 = vunpack.c.l.b16 %v269
  %v347 = vunpack.c.h.b16 %v269
  %v348 = vunpack.c.l.b16 %v270
  %v349 = vunpack.c.h.b16 %v270
  %v350 = vunpack.c.l.b16 %v271
  %v351 = vunpack.c.h.b16 %v271
  %v352 = vunpack.c.l.b16 %v272
  %v353 = vunpack.c.h.b16 %v272
  %v354 = vunpack.c.l.b16 %v273
  %v355 = vunpack.c.h.b16 %v273
  %v356 = vunpack.c.l.b16 %v274
  %v357 = vunpack.c.h.b16 %v274
  %v358 = vunpack.c.l.b16 %v275
  %v359 = vunpack.c.h.b16 %v275
  %v360 = vunpack.c.l.b16 %v276
  %v361 = vunpack.c.h.b16 %v276
  %v362 = vunpack.c.l.b16 %v277
  %v363 = vunpack.c.h.b16 %v277
  %v364 = vunpack.c.l.b16 %v278
  %v365 = vunpack.c.h.b16 %v278
  %v366 = vunpack.c.l.b16 %v279
  %v367 = vunpack.c.h.b16 %v279
  %v368 = vunpack.c.l.b16 %v280
  %v369 = vunpack.c.h.b16 %v280
  %v370 = vunpack.c.l.b16 %v281
  %v371 = vunpack.c.h.b16 %v281
  %v372 = vunpack.c.l.b16 %v282
  %v373 = vunpack.c.h.b16 %v282
  %v374 = vunpack.c.l.b16 %v283
  %v375 = vunpack.c.h.b16 %v283
  %v376 = vunpack.c.l.b16 %v284
  %v377 = vunpack.c.h.b16 %v284
  %v378 = vunpack.c.l.b16 %v285
  %v379 = vunpack.c.h.b16 %v285
  %v380 = vunpack.c.l.b16 %v286
  %v381 = vunpack.c.h.b16 %v286
  %v382 = vunpack.c.l.b16 %v287
  %v383 = vunpack.c.h.b16 %v287
  %v384 = vunpack.c.l.b16 %v288
  %v385 = vunpack.c.h.b16 %v288
  %v386 = vunpack.c.l.b16 %v289
  %v387 = vunpack.c.h.b16 %v289
  %v388 = vunpack.c.l.b16 %v290
  %v389 = vunpack.c.h.b16 %v290
  %v390 = vunpack.c.l.b16 %v291
  %v391 = vunpack.c.h.b16 %v291
  %v392 = vunpack.c.l.b16 %v292
  %v393 = vunpack.c.h.b16 %v292
  %v394 = vunpack.c.l.b16 %v293
  %v395 = vunpack.c.h.b16 %v293
  %v396 = vunpack.c.l.b16 %v294
  %v397 = vunpack.c.h.b16 %v294
  %v398 = vunpack.c.l.b16 %v295
  %v399 = vunpack.c.h.b16 %v295
  %v400 = vunpack.c.l.b16 %v296
  %v401 = vunpack.c.h.b16 %v296
  %v402 = vunpack.c.l.b16 %v297
  %v403 = vunpack.c.h.b16 %v297
  %v404 = vpack.c.b16 %v342, %v340
  %v405 = vpack.c.b16 %v343, %v341
  %v406 = vpack.c.b16 %v346, %v344
  %v407 = vpack.c.b16 %v347, %v345
  %v408 = vpack.c.b16 %v350, %v348
  %v409 = vpack.c.b16 %v351, %v349
  %v410 = vpack.c.b16 %v354, %v352
  %v411 = vpack.c.b16 %v355, %v353
  %v412 = vpack.c.b16 %v358, %v356
  %v413 = vpack.c.b16 %v359, %v357
  %v414 = vpack.c.b16 %v362, %v360
  %v415 = vpack.c.b16 %v363, %v361
  %v416 = vpack.c.b16 %v366, %v364
  %v417 = vpack.c.b16 %v367, %v365
  %v418 = vpack.c.b16 %v370, %v368
  %v419 = vpack.c.b16 %v371, %v369
  %v420 = vpack.c.b16 %v374, %v372
  %v421 = vpack.c.b16 %v375, %v373
  %v422 = vpack.c.b16 %v378, %v376
  %v423 = vpack.c.b16 %v379, %v377
  %v424 = vpack.c.b16 %v382, %v380
  %v425 = vpack.c.b16 %v383, %v381
  %v426 = vpack.c.b16 %v386, %v384
  %v427 = vpack.c.b16 %v387, %v385
  %v428 = vpack.c.b16 %v390, %v388
  %v429 = vpack.c.b16 %v391, %v389
  %v430 = vpack.c.b16 %v394, %v392
  %v431 = vpack.c.b16 %v395, %v393
  %v432 = vpack.c.b16 %v398, %v396
  %v433 = vpack.c.b16 %v399, %v397
  %v434 = vpack.c.b16 %v402, %v400
  %v435 = vpack.c.b16 %v403, %v401
  %468 = vmatprep.subr.bf16.mxu0 %v405
  %469 = vmatpush1.bf16.msra.mxu0 %v404
  %470 = vmatprep.subr.bf16.mxu0 %v407
  %471 = vmatpush1.bf16.msra.mxu0 %v406
  %472 = vmatprep.subr.bf16.mxu0 %v409
  %473 = vmatpush1.bf16.msra.mxu0 %v408
  %474 = vmatprep.subr.bf16.mxu0 %v411
  %475 = vmatpush1.bf16.msra.mxu0 %v410
  %476 = vmatprep.subr.bf16.mxu0 %v413
  %477 = vmatpush1.bf16.msra.mxu0 %v412
  %478 = vmatprep.subr.bf16.mxu0 %v415
  %479 = vmatpush1.bf16.msra.mxu0 %v414
  %480 = vmatprep.subr.bf16.mxu0 %v417
  %481 = vmatpush1.bf16.msra.mxu0 %v416
  %482 = vmatprep.subr.bf16.mxu0 %v419
  %483 = vmatpush1.bf16.msra.mxu0 %v418
  %484 = vmatprep.subr.bf16.mxu0 %v421
  %485 = vmatpush1.bf16.msra.mxu0 %v420
  %486 = vmatprep.subr.bf16.mxu0 %v423
  %487 = vmatpush1.bf16.msra.mxu0 %v422
  %488 = vmatprep.subr.bf16.mxu0 %v425
  %489 = vmatpush1.bf16.msra.mxu0 %v424
  %490 = vmatprep.subr.bf16.mxu0 %v427
  %491 = vmatpush1.bf16.msra.mxu0 %v426
  %492 = vmatprep.subr.bf16.mxu0 %v429
  %493 = vmatpush1.bf16.msra.mxu0 %v428
  %494 = vmatprep.subr.bf16.mxu0 %v431
  %495 = vmatpush1.bf16.msra.mxu0 %v430
  %496 = vmatprep.subr.bf16.mxu0 %v433
  %497 = vmatpush1.bf16.msra.mxu0 %v432
  %498 = vmatprep.subr.bf16.mxu0 %v435
  %499 = vmatpush1.bf16.msra.mxu0 %v434
  %500 = vmatprep.mubr.bf16.mxu0 %v305
  %501 = vmatmul.mubr.bf16.gmra.mrb[0].mxu0 %v304
  %v502 = vpop.f32.mrb[0].mxu0
  %v503 = vadd.f32 0.0, %v502
  %v504 = vpop.f32.mrb[0].mxu0
  %v505 = vadd.f32 0.0, %v504
  %v506 = vpop.f32.mrb[0].mxu0
  %v507 = vadd.f32 0.0, %v506
  %v508 = vpop.f32.mrb[0].mxu0
  %v509 = vadd.f32 0.0, %v508
  %510 = vdwg.mxu0
  %s511 = scalar_lea.vmem %s2, 32
  %512 = vst [vmem:[%s511] sm:$0xff] %v503
  %513 = vst [vmem:[%s511 + $0x8] sm:$0xff] %v505
  %514 = vst [vmem:[%s511 + $0x10] sm:$0xff] %v507
  %515 = vst [vmem:[%s511 + $0x18] sm:$0xff] %v509
  %s516 = scalar_lea.vmem %s0, 32
  %v517 = vld [vmem:[%s516] sm:$0xff]
  %v518 = vld [vmem:[%s516 + $0x8] sm:$0xff]
  %s519 = scalar_lea.vmem %s1, 512
  %v520 = vld [vmem:[%s519] sm:$0xff]
  %v521 = vld [vmem:[%s519 + $0x8] sm:$0xff]
  %v522 = vld [vmem:[%s519 + $0x10] sm:$0xff]
  %v523 = vld [vmem:[%s519 + $0x18] sm:$0xff]
  %v524 = vld [vmem:[%s519 + $0x20] sm:$0xff]
  %v525 = vld [vmem:[%s519 + $0x28] sm:$0xff]
  %v526 = vld [vmem:[%s519 + $0x30] sm:$0xff]
  %v527 = vld [vmem:[%s519 + $0x38] sm:$0xff]
  %v528 = vld [vmem:[%s519 + $0x40] sm:$0xff]
  %v529 = vld [vmem:[%s519 + $0x48] sm:$0xff]
  %v530 = vld [vmem:[%s519 + $0x50] sm:$0xff]
  %v531 = vld [vmem:[%s519 + $0x58] sm:$0xff]
  %v532 = vld [vmem:[%s519 + $0x60] sm:$0xff]
  %v533 = vld [vmem:[%s519 + $0x68] sm:$0xff]
  %v534 = vld [vmem:[%s519 + $0x70] sm:$0xff]
  %v535 = vld [vmem:[%s519 + $0x78] sm:$0xff]
  %v536 = vld [vmem:[%s519 + $0x80] sm:$0xff]
  %v537 = vld [vmem:[%s519 + $0x88] sm:$0xff]
  %v538 = vld [vmem:[%s519 + $0x90] sm:$0xff]
  %v539 = vld [vmem:[%s519 + $0x98] sm:$0xff]
  %v540 = vld [vmem:[%s519 + $0xa0] sm:$0xff]
  %v541 = vld [vmem:[%s519 + $0xa8] sm:$0xff]
  %v542 = vld [vmem:[%s519 + $0xb0] sm:$0xff]
  %v543 = vld [vmem:[%s519 + $0xb8] sm:$0xff]
  %v544 = vld [vmem:[%s519 + $0xc0] sm:$0xff]
  %v545 = vld [vmem:[%s519 + $0xc8] sm:$0xff]
  %v546 = vld [vmem:[%s519 + $0xd0] sm:$0xff]
  %v547 = vld [vmem:[%s519 + $0xd8] sm:$0xff]
  %v548 = vld [vmem:[%s519 + $0xe0] sm:$0xff]
  %v549 = vld [vmem:[%s519 + $0xe8] sm:$0xff]
  %v550 = vld [vmem:[%s519 + $0xf0] sm:$0xff]
  %v551 = vld [vmem:[%s519 + $0xf8] sm:$0xff]
  %v554 = vunpack.c.l.b16 %v517
  %v555 = vunpack.c.h.b16 %v517
  %v556 = vunpack.c.l.b16 %v518
  %v557 = vunpack.c.h.b16 %v518
  %v558 = vpack.c.b16 %v556, %v554
  %v559 = vpack.c.b16 %v557, %v555
  %v594 = vunpack.c.l.b16 %v520
  %v595 = vunpack.c.h.b16 %v520
  %v596 = vunpack.c.l.b16 %v521
  %v597 = vunpack.c.h.b16 %v521
  %v598 = vunpack.c.l.b16 %v522
  %v599 = vunpack.c.h.b16 %v522
  %v600 = vunpack.c.l.b16 %v523
  %v601 = vunpack.c.h.b16 %v523
  %v602 = vunpack.c.l.b16 %v524
  %v603 = vunpack.c.h.b16 %v524
  %v604 = vunpack.c.l.b16 %v525
  %v605 = vunpack.c.h.b16 %v525
  %v606 = vunpack.c.l.b16 %v526
  %v607 = vunpack.c.h.b16 %v526
  %v608 = vunpack.c.l.b16 %v527
  %v609 = vunpack.c.h.b16 %v527
  %v610 = vunpack.c.l.b16 %v528
  %v611 = vunpack.c.h.b16 %v528
  %v612 = vunpack.c.l.b16 %v529
  %v613 = vunpack.c.h.b16 %v529
  %v614 = vunpack.c.l.b16 %v530
  %v615 = vunpack.c.h.b16 %v530
  %v616 = vunpack.c.l.b16 %v531
  %v617 = vunpack.c.h.b16 %v531
  %v618 = vunpack.c.l.b16 %v532
  %v619 = vunpack.c.h.b16 %v532
  %v620 = vunpack.c.l.b16 %v533
  %v621 = vunpack.c.h.b16 %v533
  %v622 = vunpack.c.l.b16 %v534
  %v623 = vunpack.c.h.b16 %v534
  %v624 = vunpack.c.l.b16 %v535
  %v625 = vunpack.c.h.b16 %v535
  %v626 = vunpack.c.l.b16 %v536
  %v627 = vunpack.c.h.b16 %v536
  %v628 = vunpack.c.l.b16 %v537
  %v629 = vunpack.c.h.b16 %v537
  %v630 = vunpack.c.l.b16 %v538
  %v631 = vunpack.c.h.b16 %v538
  %v632 = vunpack.c.l.b16 %v539
  %v633 = vunpack.c.h.b16 %v539
  %v634 = vunpack.c.l.b16 %v540
  %v635 = vunpack.c.h.b16 %v540
  %v636 = vunpack.c.l.b16 %v541
  %v637 = vunpack.c.h.b16 %v541
  %v638 = vunpack.c.l.b16 %v542
  %v639 = vunpack.c.h.b16 %v542
  %v640 = vunpack.c.l.b16 %v543
  %v641 = vunpack.c.h.b16 %v543
  %v642 = vunpack.c.l.b16 %v544
  %v643 = vunpack.c.h.b16 %v544
  %v644 = vunpack.c.l.b16 %v545
  %v645 = vunpack.c.h.b16 %v545
  %v646 = vunpack.c.l.b16 %v546
  %v647 = vunpack.c.h.b16 %v546
  %v648 = vunpack.c.l.b16 %v547
  %v649 = vunpack.c.h.b16 %v547
  %v650 = vunpack.c.l.b16 %v548
  %v651 = vunpack.c.h.b16 %v548
  %v652 = vunpack.c.l.b16 %v549
  %v653 = vunpack.c.h.b16 %v549
  %v654 = vunpack.c.l.b16 %v550
  %v655 = vunpack.c.h.b16 %v550
  %v656 = vunpack.c.l.b16 %v551
  %v657 = vunpack.c.h.b16 %v551
  %v658 = vpack.c.b16 %v596, %v594
  %v659 = vpack.c.b16 %v597, %v595
  %v660 = vpack.c.b16 %v600, %v598
  %v661 = vpack.c.b16 %v601, %v599
  %v662 = vpack.c.b16 %v604, %v602
  %v663 = vpack.c.b16 %v605, %v603
  %v664 = vpack.c.b16 %v608, %v606
  %v665 = vpack.c.b16 %v609, %v607
  %v666 = vpack.c.b16 %v612, %v610
  %v667 = vpack.c.b16 %v613, %v611
  %v668 = vpack.c.b16 %v616, %v614
  %v669 = vpack.c.b16 %v617, %v615
  %v670 = vpack.c.b16 %v620, %v618
  %v671 = vpack.c.b16 %v621, %v619
  %v672 = vpack.c.b16 %v624, %v622
  %v673 = vpack.c.b16 %v625, %v623
  %v674 = vpack.c.b16 %v628, %v626
  %v675 = vpack.c.b16 %v629, %v627
  %v676 = vpack.c.b16 %v632, %v630
  %v677 = vpack.c.b16 %v633, %v631
  %v678 = vpack.c.b16 %v636, %v634
  %v679 = vpack.c.b16 %v637, %v635
  %v680 = vpack.c.b16 %v640, %v638
  %v681 = vpack.c.b16 %v641, %v639
  %v682 = vpack.c.b16 %v644, %v642
  %v683 = vpack.c.b16 %v645, %v643
  %v684 = vpack.c.b16 %v648, %v646
  %v685 = vpack.c.b16 %v649, %v647
  %v686 = vpack.c.b16 %v652, %v650
  %v687 = vpack.c.b16 %v653, %v651
  %v688 = vpack.c.b16 %v656, %v654
  %v689 = vpack.c.b16 %v657, %v655
  %722 = vmatprep.subr.bf16.mxu0 %v659
  %723 = vmatpush1.bf16.msra.mxu0 %v658
  %724 = vmatprep.subr.bf16.mxu0 %v661
  %725 = vmatpush1.bf16.msra.mxu0 %v660
  %726 = vmatprep.subr.bf16.mxu0 %v663
  %727 = vmatpush1.bf16.msra.mxu0 %v662
  %728 = vmatprep.subr.bf16.mxu0 %v665
  %729 = vmatpush1.bf16.msra.mxu0 %v664
  %730 = vmatprep.subr.bf16.mxu0 %v667
  %731 = vmatpush1.bf16.msra.mxu0 %v666
  %732 = vmatprep.subr.bf16.mxu0 %v669
  %733 = vmatpush1.bf16.msra.mxu0 %v668
  %734 = vmatprep.subr.bf16.mxu0 %v671
  %735 = vmatpush1.bf16.msra.mxu0 %v670
  %736 = vmatprep.subr.bf16.mxu0 %v673
  %737 = vmatpush1.bf16.msra.mxu0 %v672
  %738 = vmatprep.subr.bf16.mxu0 %v675
  %739 = vmatpush1.bf16.msra.mxu0 %v674
  %740 = vmatprep.subr.bf16.mxu0 %v677
  %741 = vmatpush1.bf16.msra.mxu0 %v676
  %742 = vmatprep.subr.bf16.mxu0 %v679
  %743 = vmatpush1.bf16.msra.mxu0 %v678
  %744 = vmatprep.subr.bf16.mxu0 %v681
  %745 = vmatpush1.bf16.msra.mxu0 %v680
  %746 = vmatprep.subr.bf16.mxu0 %v683
  %747 = vmatpush1.bf16.msra.mxu0 %v682
  %748 = vmatprep.subr.bf16.mxu0 %v685
  %749 = vmatpush1.bf16.msra.mxu0 %v684
  %750 = vmatprep.subr.bf16.mxu0 %v687
  %751 = vmatpush1.bf16.msra.mxu0 %v686
  %752 = vmatprep.subr.bf16.mxu0 %v689
  %753 = vmatpush1.bf16.msra.mxu0 %v688
  %754 = vmatprep.mubr.bf16.mxu0 %v559
  %755 = vmatmul.mubr.bf16.gmra.mrb[0].mxu0 %v558
  %v756 = vpop.f32.mrb[0].mxu0
  %v757 = vadd.f32 0.0, %v756
  %v758 = vpop.f32.mrb[0].mxu0
  %v759 = vadd.f32 0.0, %v758
  %v760 = vpop.f32.mrb[0].mxu0
  %v761 = vadd.f32 0.0, %v760
  %v762 = vpop.f32.mrb[0].mxu0
  %v763 = vadd.f32 0.0, %v762
  %764 = vdwg.mxu0
  %s765 = scalar_lea.vmem %s2, 64
  %766 = vst [vmem:[%s765] sm:$0xff] %v757
  %767 = vst [vmem:[%s765 + $0x8] sm:$0xff] %v759
  %768 = vst [vmem:[%s765 + $0x10] sm:$0xff] %v761
  %769 = vst [vmem:[%s765 + $0x18] sm:$0xff] %v763
  // Predicated region
  $region10: #{spectral_conv1d.1} parent=0 // pred_check
    _
  $region11: #{spectral_conv1d.1} parent=0 // pred_check_branch
    %771 = sbr.rel (0) target = $region13
  $region12: #{spectral_conv1d.1} parent=0 // pred_region
    _
  $region13: #{spectral_conv1d.1} parent=0 // pred_fallthru
    _
  // Predicated region
  $region14: #{spectral_conv1d.1} parent=0 // pred_check
    _
  $region15: #{spectral_conv1d.1} parent=0 // pred_check_branch
    %773 = sbr.rel (0) target = $region17
  $region16: #{spectral_conv1d.1} parent=0 // pred_region
    _
  $region17: #{spectral_conv1d.1} parent=0 // pred_fallthru
    _

</llo_original>
